<compile_context>
chip_gen: v5e
topology: v5e:2x2
jax: 0.10.0
libtpu: 0.0.40
codegen_flags: <defaults>
</compile_context>

<pallas_src>
import jax
import jax.numpy as jnp
from jax.experimental import pallas as pl
from jax.experimental.pallas import tpu as pltpu


LANE = 128            # TPU lane width
DEF_BATCH_TILE = 512  # upper bound on rows per grid step (VMEM-budgeted below)


def _round_up(n, m):
    return ((n + m - 1) // m) * m


def adv_net_kernel(x_ref, w1_ref, b1_ref, w2_ref, b2_ref, w3p_ref, b3_ref, y_ref):
    """Fused 3-layer MLP tile: (Linear->ReLU) x2 -> Linear(1) -> Sigmoid.

    x_ref:   (TB, Kp)    bf16  batch tile (lane-padded features)
    w1_ref:  (Kp, Hp)    bf16  resident (single-buffered)
    b1_ref:  (1, Hp)     f32
    w2_ref:  (Hp, Hp)    bf16  resident (single-buffered)
    b2_ref:  (1, Hp)     f32
    w3p_ref: (Hp, 128)   bf16  third-layer weight, real data in column 0
    b3_ref:  (1, 1)      f32   scalar bias in SMEM
    y_ref:   (TB, 128)   f32   lane-dense output block; column 0 is sigmoid(y)
    """
    # Layer 1: bf16 MXU matmul, f32 accumulate; bias + ReLU in f32 on the VPU.
    h1 = jnp.dot(x_ref[...], w1_ref[...], preferred_element_type=jnp.float32)
    h1 = jnp.maximum(h1 + b1_ref[...], 0.0)

    # Layer 2: cast activations to bf16 only at the MXU operand boundary.
    h2 = jnp.dot(h1.astype(jnp.bfloat16), w2_ref[...],
                 preferred_element_type=jnp.float32)
    h2 = jnp.maximum(h2 + b2_ref[...], 0.0)

    # Layer 3: out_features == 1.  MXU matmul against w3 zero-padded to
    # (Hp, 128): the MXU is idle here so this is effectively free, the store
    # stays an unmasked 128-lane vst, and no (TB, Hp) f32 temporary or XLU
    # sublane->lane relayout is materialized.  Columns 1..127 are garbage
    # (sigmoid(b3)) and are sliced off in the wrapper.
    logits = jnp.dot(h2.astype(jnp.bfloat16), w3p_ref[...],
                     preferred_element_type=jnp.float32) + b3_ref[0, 0]
    y_ref[...] = jax.nn.sigmoid(logits).astype(y_ref.dtype)


def prepare_params(params):
    """One-time weight prep: zero-pad K/H to 128-lane multiples, cast MXU
    operands to bf16, pad the (H, 1) third-layer weight to a lane-dense
    (Hp, 128) bf16 block (data in column 0), and reshape b3 for SMEM."""
    w1, b1, w2, b2, w3, b3 = params
    K, H = w1.shape
    Kp, Hp = _round_up(K, LANE), _round_up(H, LANE)

    w1p = jnp.zeros((Kp, Hp), jnp.float32).at[:K, :H].set(w1).astype(jnp.bfloat16)
    w2p = jnp.zeros((Hp, Hp), jnp.float32).at[:H, :H].set(w2).astype(jnp.bfloat16)
    b1p = jnp.zeros((1, Hp), jnp.float32).at[:, :H].set(jnp.reshape(b1, (1, H)))
    b2p = jnp.zeros((1, Hp), jnp.float32).at[:, :H].set(jnp.reshape(b2, (1, H)))
    w3p = (jnp.zeros((Hp, LANE), jnp.float32)
           .at[:H, 0:1].set(jnp.reshape(w3, (H, 1)))
           .astype(jnp.bfloat16))
    b3p = jnp.asarray(b3, jnp.float32).reshape(1, 1)
    return (w1p, b1p, w2p, b2p, w3p, b3p)


def _vmem_budget_bytes():
    """Per-core VMEM budget with headroom (v7x has 64 MiB/TC vs 128 MiB on
    v5e/v6e).  Falls back to a conservative value that fits every generation."""
    try:
        cap = int(getattr(pltpu.get_tpu_info(), "vmem_capacity_bytes", 0) or 0)
        if cap > 0:
            return (cap * 3) // 4
    except Exception:
        pass
    return 48 << 20


def adversarial_network_forward(x, prepared, *, batch_tile=DEF_BATCH_TILE):
    """x: [B, in_feature] f32.  prepared: output of prepare_params.
    Returns [B, 1] f32 in (0, 1)."""
    w1, b1, w2, b2, w3p, b3 = prepared
    Kp, Hp = w1.shape
    B, K = x.shape

    # --- VMEM budgeting: resident single-buffered weights + per-row tile cost.
    budget = _vmem_budget_bytes()
    # per batch row: x bf16 (2 pipeline bufs) + out f32 (2 bufs)
    #                + h1 f32/bf16 + h2 f32/bf16 intermediates
    per_row = 2 * Kp * 2 + 2 * LANE * 4 + Hp * (4 + 2 + 4 + 2)
    # single-buffered (Buffered(1)) resident weights + biases
    fixed = Kp * Hp * 2 + Hp * Hp * 2 + Hp * LANE * 2 + 2 * Hp * 4
    avail = budget - fixed - (2 << 20)
    if avail < per_row * 16:
        # TODO(synk): weights too large to stay resident single-buffered; would
        # need an inner pltpu.emit_pipeline over w2 column blocks from HBM.
        tb_max = 16
    else:
        tb_max = max(16, min(int(batch_tile), (avail // per_row) // 16 * 16))

    # --- Batch tile: >= 2 grid steps whenever B > 16 so "parallel" can shard
    # the batch across v7x's 2 TensorCores (no effect on 1-TC v5e/v6e).
    if B <= 16:
        tb = 16
    else:
        tb = int(min(tb_max, _round_up(-(-B // 2), 16)))
    Bp = _round_up(B, tb)
    grid = (Bp // tb,)

    # --- x: cast to bf16 (halves DMA bytes); pad only when actually needed.
    if (K != Kp) or (B != Bp):
        xp = jnp.zeros((Bp, Kp), jnp.bfloat16).at[:B, :K].set(x.astype(jnp.bfloat16))
    else:
        xp = x.astype(jnp.bfloat16)

    vmem_limit = int(min(max(fixed + tb * per_row + (8 << 20), 16 << 20), 128 << 20))

    cost = pl.CostEstimate(
        flops=2 * Bp * (Kp * Hp + Hp * Hp + Hp * LANE),
        transcendentals=Bp * LANE,
        bytes_accessed=(Bp * Kp * 2
                        + (Kp * Hp + Hp * Hp + Hp * LANE) * 2
                        + 2 * Hp * 4
                        + Bp * LANE * 4),
    )

    def pinned(shape):
        # Constant index_map => fetched once and held resident; Buffered(1)
        # stops default double-buffering from doubling weight VMEM.
        return pl.BlockSpec(shape, lambda i: (0, 0), pipeline_mode=pl.Buffered(1))

    y_pad = pl.pallas_call(
        adv_net_kernel,
        out_shape=jax.ShapeDtypeStruct((Bp, LANE), jnp.float32),
        grid=grid,
        in_specs=[
            pl.BlockSpec((tb, Kp), lambda i: (i, 0)),           # x: batch-tiled
            pinned((Kp, Hp)),                                   # w1 (resident)
            pinned((1, Hp)),                                    # b1
            pinned((Hp, Hp)),                                   # w2 (resident)
            pinned((1, Hp)),                                    # b2
            pinned((Hp, LANE)),                                 # w3 padded block
            pl.BlockSpec(memory_space=pltpu.MemorySpace.SMEM),  # b3 scalar
        ],
        out_specs=pl.BlockSpec((tb, LANE), lambda i: (i, 0)),   # lane-dense out
        compiler_params=pltpu.CompilerParams(
            dimension_semantics=("parallel",),   # batch axis -> 2 TCs on v7x
            vmem_limit_bytes=vmem_limit,
        ),
        cost_estimate=cost,
    )(xp, w1, b1, w2, b2, w3p, b3)

    # Column 0 of the lane-dense block holds the real logits' sigmoid.
    return y_pad[:B, 0:1]


def init_params(key, in_feature, hidden_size):
    """Deterministic synthetic parameter init (normal * 0.02, zero biases)."""
    k1, k2, k3 = jax.random.split(key, 3)
    w1 = 0.02 * jax.random.normal(k1, (in_feature, hidden_size), jnp.float32)
    b1 = jnp.zeros((1, hidden_size), jnp.float32)
    w2 = 0.02 * jax.random.normal(k2, (hidden_size, hidden_size), jnp.float32)
    b2 = jnp.zeros((1, hidden_size), jnp.float32)
    w3 = 0.02 * jax.random.normal(k3, (hidden_size, 1), jnp.float32)
    b3 = jnp.zeros((1, 1), jnp.float32)
    return (w1, b1, w2, b2, w3, b3)


if __name__ == "__main__":
    # Small shapes consistent with AdversarialNetwork(in_feature, hidden_size, ...)
    batch, in_feature, hidden_size = 8, 32, 32

    key = jax.random.PRNGKey(0)
    kx, kp = jax.random.split(key)
    x = jax.random.normal(kx, (batch, in_feature), jnp.float32)
    params = init_params(kp, in_feature, hidden_size)
    prep = prepare_params(params)

    y = adversarial_network_forward(x, prep)
    y = jax.block_until_ready(y)

    # Sanity check vs f32 pure-JAX reference.  Kernel uses bf16 MXU operands
    # with f32 accumulation -> results deviate slightly from the f32 PyTorch
    # reference (documented; acceptable for a sigmoid discriminator output).
    w1, b1, w2, b2, w3, b3 = params
    h1 = jnp.maximum(x @ w1 + b1, 0.0)
    h2 = jnp.maximum(h1 @ w2 + b2, 0.0)
    y_ref = jax.nn.sigmoid(h2 @ w3 + b3)
    assert y.shape == (batch, 1)
    assert jnp.allclose(y, y_ref, atol=2e-3), "mismatch vs reference"

    # TODO(synk): grl_hook / calc_coeff only scale gradients (backward pass)
    # and Dropout is identity in eval mode -- no forward-pass Pallas work.
    print("KERNEL_OK")
</pallas_src>

<mosaic_0001>
module attributes {stable_mosaic.version = 11 : i64} {
  func.func @adv_net_kernel(%arg0: i32, %arg1: memref<16x128xbf16, #tpu.memory_space<vmem>>, %arg2: memref<128x128xbf16, #tpu.memory_space<vmem>>, %arg3: memref<1x128xf32, #tpu.memory_space<vmem>>, %arg4: memref<128x128xbf16, #tpu.memory_space<vmem>>, %arg5: memref<1x128xf32, #tpu.memory_space<vmem>>, %arg6: memref<128x128xbf16, #tpu.memory_space<vmem>>, %arg7: memref<1x1xf32, #tpu.memory_space<smem>>, %arg8: memref<16x128xf32, #tpu.memory_space<vmem>>) attributes {dimension_semantics = [#tpu.dimension_semantics<parallel>], iteration_bounds = array<i64: 1>, scalar_prefetch = 0 : i64, scratch_operands = 0 : i64, tpu.core_type = #tpu.core_type<tc>, window_params = [{transform_indices = @transform_0, window_bounds = array<i64: 16, 128>}, {pipeline_mode = #tpu.pipeline_mode<synchronous>, transform_indices = @transform_1, window_bounds = array<i64: 128, 128>}, {pipeline_mode = #tpu.pipeline_mode<synchronous>, transform_indices = @transform_2, window_bounds = array<i64: 1, 128>}, {pipeline_mode = #tpu.pipeline_mode<synchronous>, transform_indices = @transform_3, window_bounds = array<i64: 128, 128>}, {pipeline_mode = #tpu.pipeline_mode<synchronous>, transform_indices = @transform_4, window_bounds = array<i64: 1, 128>}, {pipeline_mode = #tpu.pipeline_mode<synchronous>, transform_indices = @transform_5, window_bounds = array<i64: 128, 128>}, {transform_indices = @transform_6, window_bounds = array<i64: 1, 1>}, {transform_indices = @transform_7, window_bounds = array<i64: 16, 128>}]} {
    %c0 = arith.constant 0 : index
    %c0_0 = arith.constant 0 : index
    %0 = vector.load %arg1[%c0, %c0_0] : memref<16x128xbf16, #tpu.memory_space<vmem>>, vector<16x128xbf16>
    %c0_1 = arith.constant 0 : index
    %c0_2 = arith.constant 0 : index
    %1 = vector.load %arg2[%c0_1, %c0_2] : memref<128x128xbf16, #tpu.memory_space<vmem>>, vector<128x128xbf16>
    %cst = arith.constant dense<0.000000e+00> : vector<16x128xf32>
    %2 = tpu.matmul %0, %1, %cst {dimension_numbers = #tpu.dot_dimension_numbers<[1], [0], [0], [1], [0, 0, 1, 1], [], []>} : vector<16x128xbf16>, vector<128x128xbf16>, vector<16x128xf32> -> vector<16x128xf32>
    %c0_3 = arith.constant 0 : index
    %c0_4 = arith.constant 0 : index
    %3 = vector.load %arg3[%c0_3, %c0_4] : memref<1x128xf32, #tpu.memory_space<vmem>>, vector<1x128xf32>
    %4 = vector.broadcast %3 : vector<1x128xf32> to vector<16x128xf32>
    %5 = arith.addf %2, %4 : vector<16x128xf32>
    %cst_5 = arith.constant 0.000000e+00 : f32
    %6 = vector.broadcast %cst_5 : f32 to vector<16x128xf32>
    %7 = arith.maximumf %5, %6 : vector<16x128xf32>
    %8 = arith.truncf %7 : vector<16x128xf32> to vector<16x128xbf16>
    %c0_6 = arith.constant 0 : index
    %c0_7 = arith.constant 0 : index
    %9 = vector.load %arg4[%c0_6, %c0_7] : memref<128x128xbf16, #tpu.memory_space<vmem>>, vector<128x128xbf16>
    %cst_8 = arith.constant dense<0.000000e+00> : vector<16x128xf32>
    %10 = tpu.matmul %8, %9, %cst_8 {dimension_numbers = #tpu.dot_dimension_numbers<[1], [0], [0], [1], [0, 0, 1, 1], [], []>} : vector<16x128xbf16>, vector<128x128xbf16>, vector<16x128xf32> -> vector<16x128xf32>
    %c0_9 = arith.constant 0 : index
    %c0_10 = arith.constant 0 : index
    %11 = vector.load %arg5[%c0_9, %c0_10] : memref<1x128xf32, #tpu.memory_space<vmem>>, vector<1x128xf32>
    %12 = vector.broadcast %11 : vector<1x128xf32> to vector<16x128xf32>
    %13 = arith.addf %10, %12 : vector<16x128xf32>
    %cst_11 = arith.constant 0.000000e+00 : f32
    %14 = vector.broadcast %cst_11 : f32 to vector<16x128xf32>
    %15 = arith.maximumf %13, %14 : vector<16x128xf32>
    %16 = arith.truncf %15 : vector<16x128xf32> to vector<16x128xbf16>
    %c0_12 = arith.constant 0 : index
    %c0_13 = arith.constant 0 : index
    %17 = vector.load %arg6[%c0_12, %c0_13] : memref<128x128xbf16, #tpu.memory_space<vmem>>, vector<128x128xbf16>
    %cst_14 = arith.constant dense<0.000000e+00> : vector<16x128xf32>
    %18 = tpu.matmul %16, %17, %cst_14 {dimension_numbers = #tpu.dot_dimension_numbers<[1], [0], [0], [1], [0, 0, 1, 1], [], []>} : vector<16x128xbf16>, vector<128x128xbf16>, vector<16x128xf32> -> vector<16x128xf32>
    %c0_15 = arith.constant 0 : index
    %c0_16 = arith.constant 0 : index
    %19 = memref.load %arg7[%c0_15, %c0_16] : memref<1x1xf32, #tpu.memory_space<smem>>
    %20 = vector.broadcast %19 : f32 to vector<16x128xf32>
    %21 = arith.addf %18, %20 : vector<16x128xf32>
    %22 = arith.negf %21 : vector<16x128xf32>
    %23 = math.exp %22 : vector<16x128xf32>
    %cst_17 = arith.constant 1.000000e+00 : f32
    %24 = vector.broadcast %cst_17 : f32 to vector<16x128xf32>
    %25 = arith.addf %24, %23 : vector<16x128xf32>
    %26 = arith.divf %24, %25 : vector<16x128xf32>
    %c0_18 = arith.constant 0 : index
    %c0_19 = arith.constant 0 : index
    %27 = vector.load %arg8[%c0_18, %c0_19] : memref<16x128xf32, #tpu.memory_space<vmem>>, vector<16x128xf32>
    tpu.vector_store %arg8[%c0_18, %c0_19], %26 {strides = array<i32>} : memref<16x128xf32, #tpu.memory_space<vmem>>, vector<16x128xf32>,
    return
  }
  func.func @transform_0(%arg0: i32) -> (i32, i32) {
    %c0_i32 = arith.constant 0 : i32
    %c0_i32_0 = arith.constant 0 : i32
    return %arg0, %c0_i32 : i32, i32
  }
  func.func @transform_1(%arg0: i32) -> (i32, i32) {
    %c0_i32 = arith.constant 0 : i32
    %c0_i32_0 = arith.constant 0 : i32
    %c0_i32_1 = arith.constant 0 : i32
    return %c0_i32, %c0_i32_0 : i32, i32
  }
  func.func @transform_2(%arg0: i32) -> (i32, i32) {
    %c0_i32 = arith.constant 0 : i32
    %c0_i32_0 = arith.constant 0 : i32
    %c0_i32_1 = arith.constant 0 : i32
    return %c0_i32, %c0_i32_0 : i32, i32
  }
  func.func @transform_3(%arg0: i32) -> (i32, i32) {
    %c0_i32 = arith.constant 0 : i32
    %c0_i32_0 = arith.constant 0 : i32
    %c0_i32_1 = arith.constant 0 : i32
    return %c0_i32, %c0_i32_0 : i32, i32
  }
  func.func @transform_4(%arg0: i32) -> (i32, i32) {
    %c0_i32 = arith.constant 0 : i32
    %c0_i32_0 = arith.constant 0 : i32
    %c0_i32_1 = arith.constant 0 : i32
    return %c0_i32, %c0_i32_0 : i32, i32
  }
  func.func @transform_5(%arg0: i32) -> (i32, i32) {
    %c0_i32 = arith.constant 0 : i32
    %c0_i32_0 = arith.constant 0 : i32
    %c0_i32_1 = arith.constant 0 : i32
    return %c0_i32, %c0_i32_0 : i32, i32
  }
  func.func @transform_6(%arg0: i32) -> (i32, i32) {
    %c0_i32 = arith.constant 0 : i32
    %c0_i32_0 = arith.constant 0 : i32
    %c0_i32_1 = arith.constant 0 : i32
    return %c0_i32, %c0_i32_0 : i32, i32
  }
  func.func @transform_7(%arg0: i32) -> (i32, i32) {
    %c0_i32 = arith.constant 0 : i32
    %c0_i32_0 = arith.constant 0 : i32
    return %arg0, %c0_i32 : i32, i32
  }
}

</mosaic_0001>

<llo_original>
// kernel: tpu_custom_call.1
$region0: #{tpu_custom_call.1}
  #allocation0 [shape = 'u32[]', space=smem, size = 0x4, offset = 0x4, fixed_abs, tag = 'smem constant byte address 0x4 - core index']
  #allocation1 [shape = 'u32[72,128]{1,0:T(1,128)}', space=vmem, size = 0x9000, scoped, tag = 'internal scratch']
  #allocation2 [shape = 'f32[1,1]{1,0:T(1,128)S(6)}', space=smem, size = 0x200, scoped, tag = 'scoped memory for tpu_custom_call.1']
  %s0 = inlined_call_operand.hbm [shape: bf16[16,128], index: 0, kind: input, shape index: {}]
  %s1 = inlined_call_operand.hbm [shape: bf16[128,128], index: 1, kind: input, shape index: {}]
  %s2 = inlined_call_operand.vmem [shape: f32[1,128], index: 2, kind: input, shape index: {}]
  %s3 = inlined_call_operand.hbm [shape: bf16[128,128], index: 3, kind: input, shape index: {}]
  %s4 = inlined_call_operand.vmem [shape: f32[1,128], index: 4, kind: input, shape index: {}]
  %s5 = inlined_call_operand.hbm [shape: bf16[128,128], index: 5, kind: input, shape index: {}]
  %s6 = inlined_call_operand.<no memory space> [shape: f32[1,1], index: 6, kind: input, shape index: {}]
  %s7 = inlined_call_operand.hbm [shape: f32[16,128], index: 7, kind: output, shape index: {}]
  %s8 = sld [smem:[#allocation0]]
  $region54: #{tpu_custom_call.1} parent=0
    _
  %s10 = ssub.s32 1, %s8
  %s11 = scalar_select 0, %s10, %s8
  %12 = sst [smem:[#allocation2]] %s6
  $region1: #{tpu_custom_call.1} parent=0
    #allocation3 [shape = 'u8[4096]{0}', space=vmem, size = 0x1000, scoped, tag = 'input window, operand 0, single buffered']
    #allocation4 [shape = 's32[1]{0}', space=sflag, size = 0x4, scoped, tag = 'scoped memory for tpu_custom_call.1']
    #allocation5 [shape = 's32[1]{0}', space=sflag, size = 0x4, scoped, tag = 'scoped memory for tpu_custom_call.1']
    #allocation6 [shape = 'u8[32768]{0}', space=vmem, size = 0x8000, scoped, tag = 'input window, operand 1, single buffered']
    #allocation7 [shape = 's32[1]{0}', space=sflag, size = 0x4, scoped, tag = 'scoped memory for tpu_custom_call.1']
    #allocation8 [shape = 'u8[32768]{0}', space=vmem, size = 0x8000, scoped, tag = 'input window, operand 3, single buffered']
    #allocation9 [shape = 'u8[32768]{0}', space=vmem, size = 0x8000, scoped, tag = 'input window, operand 5, single buffered']
    #allocation10 [shape = 's32[1]{0}', space=sflag, size = 0x4, scoped, tag = 'scoped memory for tpu_custom_call.1']
    #allocation11 [shape = 'u8[8192]{0}', space=vmem, size = 0x2000, scoped, tag = 'output window, operand 0, single buffered']
    %13 = vsyncpa [#allocation4], 0
    %14 = vsyncpa [#allocation7], 0
    %15 = vsyncpa [#allocation10], 0
    %16 = vsyncpa [#allocation5], 0
    // Predicated region
    $region2: #{tpu_custom_call.1} parent=1 // pred_check
      _
    $region3: #{tpu_custom_call.1} parent=1 // pred_check_branch
      %18 = sbr.rel (0) target = $region5
    $region4: #{tpu_custom_call.1} parent=1 // pred_region
      %20 = vsyncadd [#allocation4], 0
      %s21 = sshll.u32 %s0, 4
      %s22 = int_to_ptr.hbm [resolvable:$true] %s21
      %s23 = sshll.u32 [#allocation3], 4
      %s24 = int_to_ptr.vmem [resolvable:$true] %s23
      %29 = dma.hbm_to_vmem [thread:$0]  %s22, 128, %s24, [#allocation4], 64, 64, 4
    $region5: #{tpu_custom_call.1} parent=1 // pred_fallthru
      _
    // Predicated region
    $region6: #{tpu_custom_call.1} parent=1 // pred_check
      _
    $region7: #{tpu_custom_call.1} parent=1 // pred_check_branch
      %31 = sbr.rel (0) target = $region9
    $region8: #{tpu_custom_call.1} parent=1 // pred_region
      %33 = vsyncadd [#allocation7], 0
      %s34 = sshll.u32 %s1, 4
      %s35 = int_to_ptr.hbm [resolvable:$true] %s34
      %s36 = sshll.u32 [#allocation6], 4
      %s37 = int_to_ptr.vmem [resolvable:$true] %s36
      %42 = dma.hbm_to_vmem [thread:$0]  %s35, 1024, %s37, [#allocation7], 64, 64, 4
    $region9: #{tpu_custom_call.1} parent=1 // pred_fallthru
      _
    // Predicated region
    $region10: #{tpu_custom_call.1} parent=1 // pred_check
      _
    $region11: #{tpu_custom_call.1} parent=1 // pred_check_branch
      %44 = sbr.rel (0) target = $region13
    $region12: #{tpu_custom_call.1} parent=1 // pred_region
      _
    $region13: #{tpu_custom_call.1} parent=1 // pred_fallthru
      _
    // Predicated region
    $region14: #{tpu_custom_call.1} parent=1 // pred_check
      _
    $region15: #{tpu_custom_call.1} parent=1 // pred_check_branch
      %46 = sbr.rel (0) target = $region17
    $region16: #{tpu_custom_call.1} parent=1 // pred_region
      %48 = vsyncadd [#allocation7], 0
      %s49 = sshll.u32 %s3, 4
      %s50 = int_to_ptr.hbm [resolvable:$true] %s49
      %s51 = sshll.u32 [#allocation8], 4
      %s52 = int_to_ptr.vmem [resolvable:$true] %s51
      %57 = dma.hbm_to_vmem [thread:$0]  %s50, 1024, %s52, [#allocation7], 64, 64, 4
    $region17: #{tpu_custom_call.1} parent=1 // pred_fallthru
      _
    // Predicated region
    $region18: #{tpu_custom_call.1} parent=1 // pred_check
      _
    $region19: #{tpu_custom_call.1} parent=1 // pred_check_branch
      %59 = sbr.rel (0) target = $region21
    $region20: #{tpu_custom_call.1} parent=1 // pred_region
      _
    $region21: #{tpu_custom_call.1} parent=1 // pred_fallthru
      _
    // Predicated region
    $region22: #{tpu_custom_call.1} parent=1 // pred_check
      _
    $region23: #{tpu_custom_call.1} parent=1 // pred_check_branch
      %61 = sbr.rel (0) target = $region25
    $region24: #{tpu_custom_call.1} parent=1 // pred_region
      %63 = vsyncadd [#allocation10], 0
      %s64 = sshll.u32 %s5, 4
      %s65 = int_to_ptr.hbm [resolvable:$true] %s64
      %s66 = sshll.u32 [#allocation9], 4
      %s67 = int_to_ptr.vmem [resolvable:$true] %s66
      %72 = dma.hbm_to_vmem [thread:$0]  %s65, 1024, %s67, [#allocation10], 64, 64, 4
    $region25: #{tpu_custom_call.1} parent=1 // pred_fallthru
      _
    // Predicated region
    $region26: #{tpu_custom_call.1} parent=1 // pred_check
      _
    $region27: #{tpu_custom_call.1} parent=1 // pred_check_branch
      %74 = sbr.rel (0) target = $region29
    $region28: #{tpu_custom_call.1} parent=1 // pred_region
      _
    $region29: #{tpu_custom_call.1} parent=1 // pred_fallthru
      _
    // Predicated region
    $region30: #{tpu_custom_call.1} parent=1 // pred_check
      _
    $region31: #{tpu_custom_call.1} parent=1 // pred_check_branch
      %76 = sbr.rel (0) target = $region33
    $region32: #{tpu_custom_call.1} parent=1 // pred_region
      %78 = dma.done [#allocation4], 128
    $region33: #{tpu_custom_call.1} parent=1 // pred_fallthru
      _
    // Predicated region
    $region34: #{tpu_custom_call.1} parent=1 // pred_check
      _
    $region35: #{tpu_custom_call.1} parent=1 // pred_check_branch
      %80 = sbr.rel (0) target = $region37
    $region36: #{tpu_custom_call.1} parent=1 // pred_region
      %82 = dma.done [#allocation7], 1024
    $region37: #{tpu_custom_call.1} parent=1 // pred_fallthru
      _
    // Predicated region
    $region38: #{tpu_custom_call.1} parent=1 // pred_check
      _
    $region39: #{tpu_custom_call.1} parent=1 // pred_check_branch
      %84 = sbr.rel (0) target = $region41
    $region40: #{tpu_custom_call.1} parent=1 // pred_region
      %86 = dma.done [#allocation7], 1024
    $region41: #{tpu_custom_call.1} parent=1 // pred_fallthru
      _
    // Predicated region
    $region42: #{tpu_custom_call.1} parent=1 // pred_check
      _
    $region43: #{tpu_custom_call.1} parent=1 // pred_check_branch
      %88 = sbr.rel (0) target = $region45
    $region44: #{tpu_custom_call.1} parent=1 // pred_region
      %90 = dma.done [#allocation10], 1024
    $region45: #{tpu_custom_call.1} parent=1 // pred_fallthru
      _
    %v91 = vld [vmem:[#allocation3] sm:$0xf]
    %v92 = vld [vmem:[#allocation3 + $0x4] sm:$0xf]
    %v93 = vld [vmem:[#allocation6] sm:$0xf]
    %v94 = vld [vmem:[#allocation6 + $0x4] sm:$0xf]
    %v95 = vld [vmem:[#allocation6 + $0x8] sm:$0xf]
    %v96 = vld [vmem:[#allocation6 + $0xc] sm:$0xf]
    %v97 = vld [vmem:[#allocation6 + $0x10] sm:$0xf]
    %v98 = vld [vmem:[#allocation6 + $0x14] sm:$0xf]
    %v99 = vld [vmem:[#allocation6 + $0x18] sm:$0xf]
    %v100 = vld [vmem:[#allocation6 + $0x1c] sm:$0xf]
    %v101 = vld [vmem:[#allocation6 + $0x20] sm:$0xf]
    %v102 = vld [vmem:[#allocation6 + $0x24] sm:$0xf]
    %v103 = vld [vmem:[#allocation6 + $0x28] sm:$0xf]
    %v104 = vld [vmem:[#allocation6 + $0x2c] sm:$0xf]
    %v105 = vld [vmem:[#allocation6 + $0x30] sm:$0xf]
    %v106 = vld [vmem:[#allocation6 + $0x34] sm:$0xf]
    %v107 = vld [vmem:[#allocation6 + $0x38] sm:$0xf]
    %v108 = vld [vmem:[#allocation6 + $0x3c] sm:$0xf]
    %v109 = vld [vmem:[%s2] sm:$0x1]
    %v111 = vperm.slane %v109, 0
    %v115 = vunpack.c.l.b16 %v91
    %v116 = vunpack.c.l.b16 %v92
    %v117 = vpack.c.b16 %v116, %v115
    %v135 = vunpack.c.l.b16 %v93
    %v136 = vunpack.c.l.b16 %v94
    %v137 = vunpack.c.l.b16 %v95
    %v138 = vunpack.c.l.b16 %v96
    %v139 = vunpack.c.l.b16 %v97
    %v140 = vunpack.c.l.b16 %v98
    %v141 = vunpack.c.l.b16 %v99
    %v142 = vunpack.c.l.b16 %v100
    %v143 = vunpack.c.l.b16 %v101
    %v144 = vunpack.c.l.b16 %v102
    %v145 = vunpack.c.l.b16 %v103
    %v146 = vunpack.c.l.b16 %v104
    %v147 = vunpack.c.l.b16 %v105
    %v148 = vunpack.c.l.b16 %v106
    %v149 = vunpack.c.l.b16 %v107
    %v150 = vunpack.c.l.b16 %v108
    %v151 = vpack.c.b16 %v136, %v135
    %v152 = vpack.c.b16 %v138, %v137
    %v153 = vpack.c.b16 %v140, %v139
    %v154 = vpack.c.b16 %v142, %v141
    %v155 = vpack.c.b16 %v144, %v143
    %v156 = vpack.c.b16 %v146, %v145
    %v157 = vpack.c.b16 %v148, %v147
    %v158 = vpack.c.b16 %v150, %v149
    %167 = vmatpush.bf16.msra.mxu0 %v158
    %168 = vmatpush.bf16.msra.mxu0 %v157
    %169 = vmatpush.bf16.msra.mxu0 %v156
    %170 = vmatpush.bf16.msra.mxu0 %v155
    %171 = vmatpush.bf16.msra.mxu0 %v154
    %172 = vmatpush.bf16.msra.mxu0 %v153
    %173 = vmatpush.bf16.msra.mxu0 %v152
    %174 = vmatpush.bf16.msra.mxu0 %v151
    %175 = vmatmul.bf16.gmra.mxu0 %v117
    %v176 = vpop.f32.mrf.mxu0
    %v177 = vadd.f32 %v111, %v176
    %v178 = vpop.f32.mrf.mxu0
    %v179 = vadd.f32 %v111, %v178
    %180 = vdwg.mxu0
    %v181 = vmax.f32 %v177, 0.0
    %v182 = vmax.f32 %v179, 0.0
    %v183 = vpack.c.bf16 %v182, %v181
    %v184 = vld [vmem:[#allocation8] sm:$0xf]
    %v185 = vld [vmem:[#allocation8 + $0x4] sm:$0xf]
    %v186 = vld [vmem:[#allocation8 + $0x8] sm:$0xf]
    %v187 = vld [vmem:[#allocation8 + $0xc] sm:$0xf]
    %v188 = vld [vmem:[#allocation8 + $0x10] sm:$0xf]
    %v189 = vld [vmem:[#allocation8 + $0x14] sm:$0xf]
    %v190 = vld [vmem:[#allocation8 + $0x18] sm:$0xf]
    %v191 = vld [vmem:[#allocation8 + $0x1c] sm:$0xf]
    %v192 = vld [vmem:[#allocation8 + $0x20] sm:$0xf]
    %v193 = vld [vmem:[#allocation8 + $0x24] sm:$0xf]
    %v194 = vld [vmem:[#allocation8 + $0x28] sm:$0xf]
    %v195 = vld [vmem:[#allocation8 + $0x2c] sm:$0xf]
    %v196 = vld [vmem:[#allocation8 + $0x30] sm:$0xf]
    %v197 = vld [vmem:[#allocation8 + $0x34] sm:$0xf]
    %v198 = vld [vmem:[#allocation8 + $0x38] sm:$0xf]
    %v199 = vld [vmem:[#allocation8 + $0x3c] sm:$0xf]
    %v200 = vld [vmem:[%s4] sm:$0x1]
    %v202 = vperm.slane %v200, 0
    %v220 = vunpack.c.l.b16 %v184
    %v221 = vunpack.c.l.b16 %v185
    %v222 = vunpack.c.l.b16 %v186
    %v223 = vunpack.c.l.b16 %v187
    %v224 = vunpack.c.l.b16 %v188
    %v225 = vunpack.c.l.b16 %v189
    %v226 = vunpack.c.l.b16 %v190
    %v227 = vunpack.c.l.b16 %v191
    %v228 = vunpack.c.l.b16 %v192
    %v229 = vunpack.c.l.b16 %v193
    %v230 = vunpack.c.l.b16 %v194
    %v231 = vunpack.c.l.b16 %v195
    %v232 = vunpack.c.l.b16 %v196
    %v233 = vunpack.c.l.b16 %v197
    %v234 = vunpack.c.l.b16 %v198
    %v235 = vunpack.c.l.b16 %v199
    %v236 = vpack.c.b16 %v221, %v220
    %v237 = vpack.c.b16 %v223, %v222
    %v238 = vpack.c.b16 %v225, %v224
    %v239 = vpack.c.b16 %v227, %v226
    %v240 = vpack.c.b16 %v229, %v228
    %v241 = vpack.c.b16 %v231, %v230
    %v242 = vpack.c.b16 %v233, %v232
    %v243 = vpack.c.b16 %v235, %v234
    %252 = vmatpush.bf16.msra.mxu0 %v243
    %253 = vmatpush.bf16.msra.mxu0 %v242
    %254 = vmatpush.bf16.msra.mxu0 %v241
    %255 = vmatpush.bf16.msra.mxu0 %v240
    %256 = vmatpush.bf16.msra.mxu0 %v239
    %257 = vmatpush.bf16.msra.mxu0 %v238
    %258 = vmatpush.bf16.msra.mxu0 %v237
    %259 = vmatpush.bf16.msra.mxu0 %v236
    %260 = vmatmul.bf16.gmra.mxu0 %v183
    %v261 = vpop.f32.mrf.mxu0
    %v262 = vadd.f32 %v202, %v261
    %v263 = vpop.f32.mrf.mxu0
    %v264 = vadd.f32 %v202, %v263
    %265 = vdwg.mxu0
    %v266 = vmax.f32 %v262, 0.0
    %v267 = vmax.f32 %v264, 0.0
    %v268 = vpack.c.bf16 %v267, %v266
    %v269 = vld [vmem:[#allocation9] sm:$0xf]
    %v270 = vld [vmem:[#allocation9 + $0x4] sm:$0xf]
    %v271 = vld [vmem:[#allocation9 + $0x8] sm:$0xf]
    %v272 = vld [vmem:[#allocation9 + $0xc] sm:$0xf]
    %v273 = vld [vmem:[#allocation9 + $0x10] sm:$0xf]
    %v274 = vld [vmem:[#allocation9 + $0x14] sm:$0xf]
    %v275 = vld [vmem:[#allocation9 + $0x18] sm:$0xf]
    %v276 = vld [vmem:[#allocation9 + $0x1c] sm:$0xf]
    %v277 = vld [vmem:[#allocation9 + $0x20] sm:$0xf]
    %v278 = vld [vmem:[#allocation9 + $0x24] sm:$0xf]
    %v279 = vld [vmem:[#allocation9 + $0x28] sm:$0xf]
    %v280 = vld [vmem:[#allocation9 + $0x2c] sm:$0xf]
    %v281 = vld [vmem:[#allocation9 + $0x30] sm:$0xf]
    %v282 = vld [vmem:[#allocation9 + $0x34] sm:$0xf]
    %v283 = vld [vmem:[#allocation9 + $0x38] sm:$0xf]
    %v284 = vld [vmem:[#allocation9 + $0x3c] sm:$0xf]
    %s285 = sld [smem:[#allocation2]]
    %v286 = vstv %s285
    %v303 = vunpack.c.l.b16 %v269
    %v304 = vunpack.c.l.b16 %v270
    %v305 = vunpack.c.l.b16 %v271
    %v306 = vunpack.c.l.b16 %v272
    %v307 = vunpack.c.l.b16 %v273
    %v308 = vunpack.c.l.b16 %v274
    %v309 = vunpack.c.l.b16 %v275
    %v310 = vunpack.c.l.b16 %v276
    %v311 = vunpack.c.l.b16 %v277
    %v312 = vunpack.c.l.b16 %v278
    %v313 = vunpack.c.l.b16 %v279
    %v314 = vunpack.c.l.b16 %v280
    %v315 = vunpack.c.l.b16 %v281
    %v316 = vunpack.c.l.b16 %v282
    %v317 = vunpack.c.l.b16 %v283
    %v318 = vunpack.c.l.b16 %v284
    %v319 = vpack.c.b16 %v304, %v303
    %v320 = vpack.c.b16 %v306, %v305
    %v321 = vpack.c.b16 %v308, %v307
    %v322 = vpack.c.b16 %v310, %v309
    %v323 = vpack.c.b16 %v312, %v311
    %v324 = vpack.c.b16 %v314, %v313
    %v325 = vpack.c.b16 %v316, %v315
    %v326 = vpack.c.b16 %v318, %v317
    %335 = vmatpush.bf16.msra.mxu0 %v326
    %336 = vmatpush.bf16.msra.mxu0 %v325
    %337 = vmatpush.bf16.msra.mxu0 %v324
    %338 = vmatpush.bf16.msra.mxu0 %v323
    %339 = vmatpush.bf16.msra.mxu0 %v322
    %340 = vmatpush.bf16.msra.mxu0 %v321
    %341 = vmatpush.bf16.msra.mxu0 %v320
    %342 = vmatpush.bf16.msra.mxu0 %v319
    %343 = vmatmul.bf16.gmra.mxu0 %v268
    %v344 = vpop.f32.mrf.mxu0
    %v345 = vadd.f32 %v286, %v344
    %v346 = vpop.f32.mrf.mxu0
    %v347 = vadd.f32 %v286, %v346
    %348 = vdwg.mxu0
    %v349 = vxor.u32 %v345, 2147483648
    %v350 = vxor.u32 %v347, 2147483648
    %v351 = vmul.f32 %v349, 1.442695
    %v352 = vpow.pop %v351
    %v353 = vmul.f32 %v350, 1.442695
    %v354 = vpow.pop %v353
    %v355 = vadd.f32 %v352, 1.0
    %v356 = vadd.f32 %v354, 1.0
    %v357 = vrcp.pop %v355
    %v358 = vmul.f32 %v355, %v357
    %v359 = vsub.f32 1.0, %v358
    %v360 = vmul.f32 %v357, %v359
    %v361 = vadd.f32 %v357, %v360
    %vm362 = vweird.f32 %v355
    %vm363 = vweird.f32 %v357
    %vm364 = vmor %vm362, %vm363
    %v365 = vsel %vm364, %v357, %v361
    %v366 = vand.u32 2147483647, %v355
    %vm367 = vcmp.eq.f32.partialorder %v366, 8.507059e+37
    %v368 = vand.u32 %v355, 2147483648
    %v369 = vor.u32 1.1754944e-38, %v368
    %v370 = vsel %vm367, %v369, %v365
    %v371 = vmul.f32 1.0, %v370
    %v372 = vrcp.pop %v356
    %v373 = vmul.f32 %v356, %v372
    %v374 = vsub.f32 1.0, %v373
    %v375 = vmul.f32 %v372, %v374
    %v376 = vadd.f32 %v372, %v375
    %vm377 = vweird.f32 %v356
    %vm378 = vweird.f32 %v372
    %vm379 = vmor %vm377, %vm378
    %v380 = vsel %vm379, %v372, %v376
    %v381 = vand.u32 2147483647, %v356
    %vm382 = vcmp.eq.f32.partialorder %v381, 8.507059e+37
    %v383 = vand.u32 %v356, 2147483648
    %v384 = vor.u32 1.1754944e-38, %v383
    %v385 = vsel %vm382, %v384, %v380
    %v386 = vmul.f32 1.0, %v385
    %387 = vst [vmem:[#allocation11] sm:$0xff] %v371
    %388 = vst [vmem:[#allocation11 + $0x8] sm:$0xff] %v386
    // Predicated region
    $region46: #{tpu_custom_call.1} parent=1 // pred_check
      _
    $region47: #{tpu_custom_call.1} parent=1 // pred_check_branch
      %390 = sbr.rel (0) target = $region49
    $region48: #{tpu_custom_call.1} parent=1 // pred_region
      %392 = vsyncadd [#allocation5], 0
      %s393 = sshll.u32 [#allocation11], 4
      %s394 = int_to_ptr.vmem [resolvable:$true] %s393
      %s395 = sshll.u32 %s7, 4
      %s396 = int_to_ptr.hbm [resolvable:$true] %s395
      %401 = dma.vmem_to_hbm [thread:$0]  %s394, 256, %s396, [#allocation5], 128, 128, 8
    $region49: #{tpu_custom_call.1} parent=1 // pred_fallthru
      _
    // Predicated region
    $region50: #{tpu_custom_call.1} parent=1 // pred_check
      _
    $region51: #{tpu_custom_call.1} parent=1 // pred_check_branch
      %403 = sbr.rel (0) target = $region53
    $region52: #{tpu_custom_call.1} parent=1 // pred_region
      %405 = dma.done [#allocation5], 256
    $region53: #{tpu_custom_call.1} parent=1 // pred_fallthru
      _
    %406 = vsyncpa [#allocation4], 1
    %407 = vsyncpa [#allocation7], 1
    %408 = vsyncpa [#allocation10], 1
    %409 = vsyncpa [#allocation5], 1

</llo_original>
